<compile_context>
chip_gen: v6e
topology: v6e:2x2x1
jax: 0.10.0
libtpu: 0.0.40
codegen_flags: <defaults>
</compile_context>

<pallas_src>
import functools

import jax
import jax.numpy as jnp
from jax.experimental import pallas as pl
from jax.experimental.pallas import tpu as pltpu


def _mlp_kernel(x_ref, w_in_ref, b_in_ref, w_h_ref, b_h_ref,
                w_out_ref, b_out_ref, o_ref, *, n_layer):
    """One row-tile of the full MLP forward (all layers fused)."""
    x = x_ref[...]                                            # [tile_n, in_dim] f32

    # input layer + activation (bf16 MXU operands, f32 accumulate / elementwise)
    r = jnp.tanh(
        jnp.dot(x.astype(jnp.bfloat16), w_in_ref[...],
                preferred_element_type=jnp.float32)
        + b_in_ref[...])                                      # [tile_n, hidden] f32

    # residual hidden layers (n_layer is compile-time -> statically unrolled)
    for i in range(n_layer):
        h = (jnp.dot(r.astype(jnp.bfloat16), w_h_ref[i],
                     preferred_element_type=jnp.float32)
             + b_h_ref[i])
        r = r + jnp.tanh(h)                                   # f32 accumulator

    # output layer (no activation); store at the true (tile_n, out_dim) shape.
    out = (jnp.dot(r.astype(jnp.bfloat16), w_out_ref[...],
                   preferred_element_type=jnp.float32)
           + b_out_ref[...])                                  # [tile_n, out_dim] f32
    o_ref[...] = out.astype(o_ref.dtype)


def prepare_params(params):
    """One-time conversion of torch-convention params to kernel layout.

    - transposes [out,in] -> [in,out] (hoisted out of the per-call path)
    - casts matmul weights to bf16 (MXU native); biases stay f32
    (Deliberate precision tradeoff: results match a bf16-operand reference,
    not the exact f32 PyTorch module.)
    """
    return {
        "w_in": params["w_in"].T.astype(jnp.bfloat16),             # [in, hidden]
        "b_in": params["b_in"].astype(jnp.float32)[None, :],       # [1, hidden]
        "w_h": jnp.transpose(params["w_h"], (0, 2, 1)).astype(jnp.bfloat16),
        "b_h": params["b_h"].astype(jnp.float32)[:, None, :],      # [L, 1, hidden]
        "w_out": params["w_out"].T.astype(jnp.bfloat16),           # [hidden, out]
        "b_out": params["b_out"].astype(jnp.float32)[None, :],     # [1, out]
    }


def _round_up(v, m):
    return ((v + m - 1) // m) * m


def mlp_forward(x, prep, *, n_layer, tile_n=1024):
    """x: [N, input_dim] f32; prep: output of prepare_params. Returns [N, out_dim] f32."""
    n, in_dim = x.shape
    hidden = prep["w_in"].shape[1]
    out_dim = prep["w_out"].shape[1]

    # Row tile: multiple of 8 sublanes, never (much) larger than the problem.
    tile_n = _round_up(max(8, tile_n), 8)
    n_ceil = _round_up(n, 8)
    tile_n = min(tile_n, n_ceil)
    # v7x megacore: for large-ish N make sure the grid has >= 2 steps so both
    # TensorCores get rows; tiny inputs stay single-step (overhead not worth it).
    if n_ceil > 256:
        tile_n = min(tile_n, _round_up(pl.cdiv(n_ceil, 2), 8))

    grid_n = pl.cdiv(n, tile_n)
    n_pad = grid_n * tile_n   # logical padded row count; x itself is NOT padded.
    # The last (partial) tile reads OOB rows (garbage); rows are independent and
    # the padded output rows are sliced off below.

    # Advisory cost hint for XLA's scheduler around the custom call.
    flops = 2 * n * (in_dim * hidden + n_layer * hidden * hidden + hidden * out_dim)
    transcendentals = n * hidden * (1 + n_layer)
    weight_bytes = ((prep["w_in"].size + prep["w_h"].size + prep["w_out"].size) * 2
                    + (prep["b_in"].size + prep["b_h"].size + prep["b_out"].size) * 4)
    bytes_accessed = n * (in_dim + out_dim) * 4 + weight_bytes

    kernel = functools.partial(_mlp_kernel, n_layer=n_layer)

    out = pl.pallas_call(
        kernel,
        out_shape=jax.ShapeDtypeStruct((n_pad, out_dim), x.dtype),
        grid=(grid_n,),
        in_specs=[
            # NOTE: could add pipeline_mode=pl.Buffered(3) here for very large N;
            # double-buffering is already ample for these tiny per-tile DMAs.
            pl.BlockSpec((tile_n, in_dim), lambda i: (i, 0)),        # x row tile
            pl.BlockSpec(prep["w_in"].shape, lambda i: (0, 0)),      # VMEM-resident
            pl.BlockSpec(prep["b_in"].shape, lambda i: (0, 0)),      # VMEM-resident
            pl.BlockSpec(prep["w_h"].shape, lambda i: (0, 0, 0)),    # VMEM-resident
            pl.BlockSpec(prep["b_h"].shape, lambda i: (0, 0, 0)),    # VMEM-resident
            pl.BlockSpec(prep["w_out"].shape, lambda i: (0, 0)),     # VMEM-resident
            pl.BlockSpec(prep["b_out"].shape, lambda i: (0, 0)),     # VMEM-resident
        ],
        # True output shape: last block dim equals the full array dim (legal);
        # accepts vst.msk but cuts HBM writeback bytes 16x vs a 128-lane f32 pad.
        out_specs=pl.BlockSpec((tile_n, out_dim), lambda i: (i, 0)),
        compiler_params=pltpu.CompilerParams(
            dimension_semantics=("parallel",),   # megacore rows on v7x
        ),
        cost_estimate=pl.CostEstimate(
            flops=flops,
            transcendentals=transcendentals,
            bytes_accessed=bytes_accessed,
        ),
    )(x, prep["w_in"], prep["b_in"], prep["w_h"], prep["b_h"],
      prep["w_out"], prep["b_out"])

    return out[:n]


def init_params(key, input_dim, hidden_dim, output_dim, n_layer):
    """Deterministic init mimicking torch.nn.Linear (uniform +-1/sqrt(fan_in))."""
    ks = jax.random.split(key, 6)

    def u(k, shape, fan_in):
        bound = 1.0 / jnp.sqrt(fan_in)
        return jax.random.uniform(k, shape, jnp.float32, -bound, bound)

    return {
        "w_in": u(ks[0], (hidden_dim, input_dim), input_dim),
        "b_in": u(ks[1], (hidden_dim,), input_dim),
        "w_h": u(ks[2], (n_layer, hidden_dim, hidden_dim), hidden_dim),
        "b_h": u(ks[3], (n_layer, hidden_dim), hidden_dim),
        "w_out": u(ks[4], (output_dim, hidden_dim), hidden_dim),
        "b_out": u(ks[5], (output_dim,), hidden_dim),
    }


def mlp_reference_f32(x, params, *, n_layer):
    """Pure-JAX f32 reference matching the PyTorch forward exactly."""
    r = jnp.tanh(x @ params["w_in"].T + params["b_in"])
    for i in range(n_layer):
        r = r + jnp.tanh(r @ params["w_h"][i].T + params["b_h"][i])
    return r @ params["w_out"].T + params["b_out"]


def mlp_reference_bf16(x, params, *, n_layer):
    """Reference emulating the kernel's numerics (bf16 operands, f32 acc)."""
    def mm(a, w_t):  # a @ w_t.T with bf16 operands, f32 accumulate
        return jnp.dot(a.astype(jnp.bfloat16), w_t.T.astype(jnp.bfloat16),
                       preferred_element_type=jnp.float32)
    r = jnp.tanh(mm(x, params["w_in"]) + params["b_in"])
    for i in range(n_layer):
        r = r + jnp.tanh(mm(r, params["w_h"][i]) + params["b_h"][i])
    return mm(r, params["w_out"]) + params["b_out"]


def _check(x2d, params, prep, n_layer, tile_n):
    out = mlp_forward(x2d, prep, n_layer=n_layer, tile_n=tile_n)
    out = jax.block_until_ready(out)
    ref_bf16 = mlp_reference_bf16(x2d, params, n_layer=n_layer)
    ref_f32 = mlp_reference_f32(x2d, params, n_layer=n_layer)
    assert out.shape == ref_f32.shape
    # Tight check vs a reference with the same (bf16-operand) numerics.
    assert jnp.allclose(out, ref_bf16, atol=1e-3, rtol=1e-3), \
        "mismatch vs bf16-emulating reference"
    # Loose semantic sanity check vs the exact f32 PyTorch-equivalent math.
    assert jnp.allclose(out, ref_f32, atol=1e-1, rtol=1e-1), \
        "mismatch vs f32 reference"
    return out


if __name__ == "__main__":
    # Small shapes consistent with the module's forward:
    # batch=2, seq=8 flattened to N=16 rows, input_dim=16, hidden=32, output=8.
    input_dim, hidden_dim, output_dim, n_layer = 16, 32, 8, 2
    batch, seq = 2, 8

    key = jax.random.PRNGKey(0)
    k_x, k_p, k_x2, k_x3 = jax.random.split(key, 4)

    params = init_params(k_p, input_dim, hidden_dim, output_dim, n_layer)
    prep = prepare_params(params)   # one-time layout prep (transpose/cast)

    # Primary case: tiny N, single-tile grid.
    x = jax.random.normal(k_x, (batch, seq, input_dim), jnp.float32)
    x2d = x.reshape(batch * seq, input_dim)
    out = _check(x2d, params, prep, n_layer, tile_n=1024)
    out = out.reshape(batch, seq, output_dim)
    assert out.shape == (batch, seq, output_dim)

    # Multi-tile grid with a partial last tile (N=80, tile=32 -> 3 steps).
    x_mid = jax.random.normal(k_x2, (80, input_dim), jnp.float32)
    _check(x_mid, params, prep, n_layer, tile_n=32)

    # Larger N: default tile, >=2-step grid (megacore split path), partial tile.
    x_big = jax.random.normal(k_x3, (3000, input_dim), jnp.float32)
    _check(x_big, params, prep, n_layer, tile_n=1024)

    print("KERNEL_OK")
</pallas_src>

<mosaic_0001>
module attributes {stable_mosaic.version = 11 : i64} {
  func.func @_mlp_kernel(%arg0: i32, %arg1: memref<16x16xf32, #tpu.memory_space<vmem>>, %arg2: memref<16x32xbf16, #tpu.memory_space<vmem>>, %arg3: memref<1x32xf32, #tpu.memory_space<vmem>>, %arg4: memref<2x32x32xbf16, #tpu.memory_space<vmem>>, %arg5: memref<2x1x32xf32, #tpu.memory_space<vmem>>, %arg6: memref<32x8xbf16, #tpu.memory_space<vmem>>, %arg7: memref<1x8xf32, #tpu.memory_space<vmem>>, %arg8: memref<16x8xf32, #tpu.memory_space<vmem>>) attributes {dimension_semantics = [#tpu.dimension_semantics<parallel>], iteration_bounds = array<i64: 1>, scalar_prefetch = 0 : i64, scratch_operands = 0 : i64, tpu.core_type = #tpu.core_type<tc>, window_params = [{transform_indices = @transform_0, window_bounds = array<i64: 16, 16>}, {pipeline_mode = #tpu.pipeline_mode<synchronous>, transform_indices = @transform_1, window_bounds = array<i64: 16, 32>}, {pipeline_mode = #tpu.pipeline_mode<synchronous>, transform_indices = @transform_2, window_bounds = array<i64: 1, 32>}, {pipeline_mode = #tpu.pipeline_mode<synchronous>, transform_indices = @transform_3, window_bounds = array<i64: 2, 32, 32>}, {pipeline_mode = #tpu.pipeline_mode<synchronous>, transform_indices = @transform_4, window_bounds = array<i64: 2, 1, 32>}, {pipeline_mode = #tpu.pipeline_mode<synchronous>, transform_indices = @transform_5, window_bounds = array<i64: 32, 8>}, {pipeline_mode = #tpu.pipeline_mode<synchronous>, transform_indices = @transform_6, window_bounds = array<i64: 1, 8>}, {transform_indices = @transform_7, window_bounds = array<i64: 16, 8>}]} {
    %c0 = arith.constant 0 : index
    %c0_0 = arith.constant 0 : index
    %0 = vector.load %arg1[%c0, %c0_0] : memref<16x16xf32, #tpu.memory_space<vmem>>, vector<16x16xf32>
    %1 = arith.truncf %0 : vector<16x16xf32> to vector<16x16xbf16>
    %c0_1 = arith.constant 0 : index
    %c0_2 = arith.constant 0 : index
    %2 = vector.load %arg2[%c0_1, %c0_2] : memref<16x32xbf16, #tpu.memory_space<vmem>>, vector<16x32xbf16>
    %cst = arith.constant dense<0.000000e+00> : vector<16x32xf32>
    %3 = tpu.matmul %1, %2, %cst {dimension_numbers = #tpu.dot_dimension_numbers<[1], [0], [0], [1], [0, 0, 1, 1], [], []>} : vector<16x16xbf16>, vector<16x32xbf16>, vector<16x32xf32> -> vector<16x32xf32>
    %c0_3 = arith.constant 0 : index
    %c0_4 = arith.constant 0 : index
    %4 = vector.load %arg3[%c0_3, %c0_4] : memref<1x32xf32, #tpu.memory_space<vmem>>, vector<1x32xf32>
    %5 = vector.broadcast %4 : vector<1x32xf32> to vector<16x32xf32>
    %6 = arith.addf %3, %5 : vector<16x32xf32>
    %7 = math.tanh %6 : vector<16x32xf32>
    %8 = arith.truncf %7 : vector<16x32xf32> to vector<16x32xbf16>
    %c0_5 = arith.constant 0 : index
    %c0_6 = arith.constant 0 : index
    %c0_7 = arith.constant 0 : index
    %9 = vector.load %arg4[%c0_5, %c0_6, %c0_7] : memref<2x32x32xbf16, #tpu.memory_space<vmem>>, vector<1x32x32xbf16>
    %10 = vector.shape_cast %9 : vector<1x32x32xbf16> to vector<32x32xbf16>
    %cst_8 = arith.constant dense<0.000000e+00> : vector<16x32xf32>
    %11 = tpu.matmul %8, %10, %cst_8 {dimension_numbers = #tpu.dot_dimension_numbers<[1], [0], [0], [1], [0, 0, 1, 1], [], []>} : vector<16x32xbf16>, vector<32x32xbf16>, vector<16x32xf32> -> vector<16x32xf32>
    %c0_9 = arith.constant 0 : index
    %c0_10 = arith.constant 0 : index
    %c0_11 = arith.constant 0 : index
    %12 = vector.load %arg5[%c0_9, %c0_10, %c0_11] : memref<2x1x32xf32, #tpu.memory_space<vmem>>, vector<1x1x32xf32>
    %13 = vector.shape_cast %12 : vector<1x1x32xf32> to vector<1x32xf32>
    %14 = vector.broadcast %13 : vector<1x32xf32> to vector<16x32xf32>
    %15 = arith.addf %11, %14 : vector<16x32xf32>
    %16 = math.tanh %15 : vector<16x32xf32>
    %17 = arith.addf %7, %16 : vector<16x32xf32>
    %18 = arith.truncf %17 : vector<16x32xf32> to vector<16x32xbf16>
    %c1 = arith.constant 1 : index
    %c0_12 = arith.constant 0 : index
    %c0_13 = arith.constant 0 : index
    %19 = vector.load %arg4[%c1, %c0_12, %c0_13] : memref<2x32x32xbf16, #tpu.memory_space<vmem>>, vector<1x32x32xbf16>
    %20 = vector.shape_cast %19 : vector<1x32x32xbf16> to vector<32x32xbf16>
    %cst_14 = arith.constant dense<0.000000e+00> : vector<16x32xf32>
    %21 = tpu.matmul %18, %20, %cst_14 {dimension_numbers = #tpu.dot_dimension_numbers<[1], [0], [0], [1], [0, 0, 1, 1], [], []>} : vector<16x32xbf16>, vector<32x32xbf16>, vector<16x32xf32> -> vector<16x32xf32>
    %c1_15 = arith.constant 1 : index
    %c0_16 = arith.constant 0 : index
    %c0_17 = arith.constant 0 : index
    %22 = vector.load %arg5[%c1_15, %c0_16, %c0_17] : memref<2x1x32xf32, #tpu.memory_space<vmem>>, vector<1x1x32xf32>
    %23 = vector.shape_cast %22 : vector<1x1x32xf32> to vector<1x32xf32>
    %24 = vector.broadcast %23 : vector<1x32xf32> to vector<16x32xf32>
    %25 = arith.addf %21, %24 : vector<16x32xf32>
    %26 = math.tanh %25 : vector<16x32xf32>
    %27 = arith.addf %17, %26 : vector<16x32xf32>
    %28 = arith.truncf %27 : vector<16x32xf32> to vector<16x32xbf16>
    %c0_18 = arith.constant 0 : index
    %c0_19 = arith.constant 0 : index
    %29 = vector.load %arg6[%c0_18, %c0_19] : memref<32x8xbf16, #tpu.memory_space<vmem>>, vector<32x8xbf16>
    %cst_20 = arith.constant dense<0.000000e+00> : vector<16x8xf32>
    %30 = tpu.matmul %28, %29, %cst_20 {dimension_numbers = #tpu.dot_dimension_numbers<[1], [0], [0], [1], [0, 0, 1, 1], [], []>} : vector<16x32xbf16>, vector<32x8xbf16>, vector<16x8xf32> -> vector<16x8xf32>
    %c0_21 = arith.constant 0 : index
    %c0_22 = arith.constant 0 : index
    %31 = vector.load %arg7[%c0_21, %c0_22] : memref<1x8xf32, #tpu.memory_space<vmem>>, vector<1x8xf32>
    %32 = vector.broadcast %31 : vector<1x8xf32> to vector<16x8xf32>
    %33 = arith.addf %30, %32 : vector<16x8xf32>
    %c0_23 = arith.constant 0 : index
    %c0_24 = arith.constant 0 : index
    %34 = vector.load %arg8[%c0_23, %c0_24] : memref<16x8xf32, #tpu.memory_space<vmem>>, vector<16x8xf32>
    tpu.vector_store %arg8[%c0_23, %c0_24], %33 {strides = array<i32>} : memref<16x8xf32, #tpu.memory_space<vmem>>, vector<16x8xf32>,
    return
  }
  func.func @transform_0(%arg0: i32) -> (i32, i32) {
    %c0_i32 = arith.constant 0 : i32
    %c0_i32_0 = arith.constant 0 : i32
    return %arg0, %c0_i32 : i32, i32
  }
  func.func @transform_1(%arg0: i32) -> (i32, i32) {
    %c0_i32 = arith.constant 0 : i32
    %c0_i32_0 = arith.constant 0 : i32
    %c0_i32_1 = arith.constant 0 : i32
    return %c0_i32, %c0_i32_0 : i32, i32
  }
  func.func @transform_2(%arg0: i32) -> (i32, i32) {
    %c0_i32 = arith.constant 0 : i32
    %c0_i32_0 = arith.constant 0 : i32
    %c0_i32_1 = arith.constant 0 : i32
    return %c0_i32, %c0_i32_0 : i32, i32
  }
  func.func @transform_3(%arg0: i32) -> (i32, i32, i32) {
    %c0_i32 = arith.constant 0 : i32
    %c0_i32_0 = arith.constant 0 : i32
    %c0_i32_1 = arith.constant 0 : i32
    %c0_i32_2 = arith.constant 0 : i32
    return %c0_i32, %c0_i32_0, %c0_i32_1 : i32, i32, i32
  }
  func.func @transform_4(%arg0: i32) -> (i32, i32, i32) {
    %c0_i32 = arith.constant 0 : i32
    %c0_i32_0 = arith.constant 0 : i32
    %c0_i32_1 = arith.constant 0 : i32
    %c0_i32_2 = arith.constant 0 : i32
    return %c0_i32, %c0_i32_0, %c0_i32_1 : i32, i32, i32
  }
  func.func @transform_5(%arg0: i32) -> (i32, i32) {
    %c0_i32 = arith.constant 0 : i32
    %c0_i32_0 = arith.constant 0 : i32
    %c0_i32_1 = arith.constant 0 : i32
    return %c0_i32, %c0_i32_0 : i32, i32
  }
  func.func @transform_6(%arg0: i32) -> (i32, i32) {
    %c0_i32 = arith.constant 0 : i32
    %c0_i32_0 = arith.constant 0 : i32
    %c0_i32_1 = arith.constant 0 : i32
    return %c0_i32, %c0_i32_0 : i32, i32
  }
  func.func @transform_7(%arg0: i32) -> (i32, i32) {
    %c0_i32 = arith.constant 0 : i32
    %c0_i32_0 = arith.constant 0 : i32
    return %arg0, %c0_i32 : i32, i32
  }
}

</mosaic_0001>

<llo_original>
// kernel: tpu_custom_call.1
$region0: #{tpu_custom_call.1}
  #allocation0 [shape = 'u32[]', space=smem, size = 0x4, offset = 0x4, fixed_abs, tag = 'smem constant byte address 0x4 - core index']
  #allocation1 [shape = 'u32[144,128]{1,0:T(1,128)}', space=vmem, size = 0x12000, scoped, tag = 'internal scratch']
  %s0 = inlined_call_operand.vmem [shape: f32[16,16], index: 0, kind: input, shape index: {}]
  %s1 = inlined_call_operand.hbm [shape: bf16[16,32], index: 1, kind: input, shape index: {}]
  %s2 = inlined_call_operand.vmem [shape: f32[1,32], index: 2, kind: input, shape index: {}]
  %s3 = inlined_call_operand.hbm [shape: bf16[2,32,32], index: 3, kind: input, shape index: {}]
  %s4 = inlined_call_operand.vmem [shape: f32[2,1,32], index: 4, kind: input, shape index: {}]
  %s5 = inlined_call_operand.vmem [shape: bf16[32,8], index: 5, kind: input, shape index: {}]
  %s6 = inlined_call_operand.vmem [shape: f32[1,8], index: 6, kind: input, shape index: {}]
  %s7 = inlined_call_operand.vmem [shape: f32[16,8], index: 7, kind: output, shape index: {}]
  %s8 = sld [smem:[#allocation0]]
  $region46: #{tpu_custom_call.1} parent=0
    _
  %s10 = ssub.s32 1, %s8
  %s11 = scalar_select 0, %s10, %s8
  $region1: #{tpu_custom_call.1} parent=0
    #allocation2 [shape = 'u8[4096]{0}', space=vmem, size = 0x1000, scoped, tag = 'input window, operand 1, single buffered']
    #allocation3 [shape = 's32[1]{0}', space=sflag, size = 0x4, scoped, tag = 'scoped memory for tpu_custom_call.1']
    #allocation4 [shape = 'u8[16384]{0}', space=vmem, size = 0x4000, scoped, tag = 'input window, operand 3, single buffered']
    #allocation5 [shape = 's32[1]{0}', space=sflag, size = 0x4, scoped, tag = 'scoped memory for tpu_custom_call.1']
    %12 = vsyncpa [#allocation3], 0
    %13 = vsyncpa [#allocation5], 0
    // Predicated region
    $region2: #{tpu_custom_call.1} parent=1 // pred_check
      _
    $region3: #{tpu_custom_call.1} parent=1 // pred_check_branch
      %15 = sbr.rel (0) target = $region5
    $region4: #{tpu_custom_call.1} parent=1 // pred_region
      _
    $region5: #{tpu_custom_call.1} parent=1 // pred_fallthru
      _
    // Predicated region
    $region6: #{tpu_custom_call.1} parent=1 // pred_check
      _
    $region7: #{tpu_custom_call.1} parent=1 // pred_check_branch
      %17 = sbr.rel (0) target = $region9
    $region8: #{tpu_custom_call.1} parent=1 // pred_region
      %s19 = ssub.s32 128, 128
      %20 = vsyncadd [#allocation3], %s19
      %s21 = sshll.u32 [#allocation2], 4
      %s22 = int_to_ptr.vmem [resolvable:$true] %s21
      %27 = dma.hbm_to_vmem [thread:$0]  %s1, 128, %s22, [#allocation3], 64, 64, 4
    $region9: #{tpu_custom_call.1} parent=1 // pred_fallthru
      _
    // Predicated region
    $region10: #{tpu_custom_call.1} parent=1 // pred_check
      _
    $region11: #{tpu_custom_call.1} parent=1 // pred_check_branch
      %29 = sbr.rel (0) target = $region13
    $region12: #{tpu_custom_call.1} parent=1 // pred_region
      _
    $region13: #{tpu_custom_call.1} parent=1 // pred_fallthru
      _
    // Predicated region
    $region14: #{tpu_custom_call.1} parent=1 // pred_check
      _
    $region15: #{tpu_custom_call.1} parent=1 // pred_check_branch
      %31 = sbr.rel (0) target = $region17
    $region16: #{tpu_custom_call.1} parent=1 // pred_region
      %s33 = ssub.s32 512, 512
      %34 = vsyncadd [#allocation5], %s33
      %s35 = sshll.u32 [#allocation4], 4
      %s36 = int_to_ptr.vmem [resolvable:$true] %s35
      %41 = dma.hbm_to_vmem [thread:$0]  %s3, 512, %s36, [#allocation5], 64, 64, 4
    $region17: #{tpu_custom_call.1} parent=1 // pred_fallthru
      _
    // Predicated region
    $region18: #{tpu_custom_call.1} parent=1 // pred_check
      _
    $region19: #{tpu_custom_call.1} parent=1 // pred_check_branch
      %43 = sbr.rel (0) target = $region21
    $region20: #{tpu_custom_call.1} parent=1 // pred_region
      _
    $region21: #{tpu_custom_call.1} parent=1 // pred_fallthru
      _
    // Predicated region
    $region22: #{tpu_custom_call.1} parent=1 // pred_check
      _
    $region23: #{tpu_custom_call.1} parent=1 // pred_check_branch
      %45 = sbr.rel (0) target = $region25
    $region24: #{tpu_custom_call.1} parent=1 // pred_region
      _
    $region25: #{tpu_custom_call.1} parent=1 // pred_fallthru
      _
    // Predicated region
    $region26: #{tpu_custom_call.1} parent=1 // pred_check
      _
    $region27: #{tpu_custom_call.1} parent=1 // pred_check_branch
      %47 = sbr.rel (0) target = $region29
    $region28: #{tpu_custom_call.1} parent=1 // pred_region
      _
    $region29: #{tpu_custom_call.1} parent=1 // pred_fallthru
      _
    // Predicated region
    $region30: #{tpu_custom_call.1} parent=1 // pred_check
      _
    $region31: #{tpu_custom_call.1} parent=1 // pred_check_branch
      %49 = sbr.rel (0) target = $region33
    $region32: #{tpu_custom_call.1} parent=1 // pred_region
      %50 = dma.done [#allocation3], 128
    $region33: #{tpu_custom_call.1} parent=1 // pred_fallthru
      _
    // Predicated region
    $region34: #{tpu_custom_call.1} parent=1 // pred_check
      _
    $region35: #{tpu_custom_call.1} parent=1 // pred_check_branch
      %52 = sbr.rel (0) target = $region37
    $region36: #{tpu_custom_call.1} parent=1 // pred_region
      %53 = dma.done [#allocation5], 512
    $region37: #{tpu_custom_call.1} parent=1 // pred_fallthru
      _
    %v55 = vld [vmem:[%s0] sm:$0xff]
    %v56 = vld [vmem:[%s0 + $0x8] sm:$0xff]
    %v57 = vpack.c.bf16 %v56, %v55
    %v58 = vld [vmem:[#allocation2] sm:$0xf]
    %v59 = vld [vmem:[#allocation2 + $0x4] sm:$0xf]
    %v60 = vld [vmem:[%s2] sm:$0x1]
    %v62 = vlaneseq
    %v63 = vshrl.u32 %v62, 7
    %v64 = vsub.s32 0, %v63
    %v65 = vrot.slane %v60, %v64
    %v69 = vunpack.c.l.b16 %v58
    %v70 = vunpack.c.l.b16 %v59
    %v71 = vpack.c.b16 %v70, %v69
    %vm73 = vcmask 130048
    %v75 = vsel %vm73, %v57, 0
    %77 = vmatprep.subr.bf16.mxu0 0
    %78 = vmatpush1.bf16.msra.mxu0 0
    %79 = vmatprep.subr.bf16.mxu0 0
    %80 = vmatpush1.bf16.msra.mxu0 0
    %81 = vmatprep.subr.bf16.mxu0 0
    %82 = vmatpush1.bf16.msra.mxu0 0
    %83 = vmatprep.subr.bf16.mxu0 0
    %84 = vmatpush1.bf16.msra.mxu0 0
    %85 = vmatprep.subr.bf16.mxu0 0
    %86 = vmatpush1.bf16.msra.mxu0 0
    %87 = vmatprep.subr.bf16.mxu0 0
    %88 = vmatpush1.bf16.msra.mxu0 0
    %89 = vmatprep.subr.bf16.mxu0 0
    %90 = vmatpush1.bf16.msra.mxu0 0
    %91 = vmatprep.subr.bf16.mxu0 0
    %92 = vmatpush1.bf16.msra.mxu0 %v71
    %93 = vmatprep.subr.bf16.mxu0 0
    %94 = vmatpush2.bf16.msra.mxu0 0
    %95 = vmatprep.subr.bf16.mxu0 0
    %96 = vmatpush2.bf16.msra.mxu0 0
    %97 = vmatprep.subr.bf16.mxu0 0
    %98 = vmatpush2.bf16.msra.mxu0 0
    %99 = vmatprep.subr.bf16.mxu0 0
    %100 = vmatpush2.bf16.msra.mxu0 0
    %101 = vmatprep.subr.bf16.mxu0 0
    %102 = vmatpush2.bf16.msra.mxu0 0
    %103 = vmatprep.subr.bf16.mxu0 0
    %104 = vmatpush2.bf16.msra.mxu0 0
    %105 = vmatprep.subr.bf16.mxu0 0
    %106 = vmatpush2.bf16.msra.mxu0 0
    %107 = vmatprep.subr.bf16.mxu0 0
    %108 = vmatpush2.bf16.msra.mxu0 0
    %109 = vmatprep.mubr.bf16.mxu0 0
    %110 = vmatmul.mubr.bf16.gmra.mxu0 %v75
    %v111 = vpop.f32.mrf.mxu0
    %v112 = vadd.f32 %v65, %v111
    %v113 = vpop.f32.mrf.mxu0
    %v114 = vpop.f32.mrf.mxu0
    %v115 = vadd.f32 %v65, %v114
    %v116 = vpop.f32.mrf.mxu0
    %117 = vdwg.mxu0
    %v118 = vtanh.pop %v112
    %v119 = vtanh.pop %v115
    %v120 = vpack.c.bf16 %v119, %v118
    %v121 = vld [vmem:[#allocation4] sm:$0xf]
    %v122 = vld [vmem:[#allocation4 + $0x4] sm:$0xf]
    %v123 = vld [vmem:[#allocation4 + $0x8] sm:$0xf]
    %v124 = vld [vmem:[#allocation4 + $0xc] sm:$0xf]
    %v125 = vld [vmem:[%s4] sm:$0x1]
    %v127 = vlaneseq
    %v128 = vshrl.u32 %v127, 7
    %v129 = vsub.s32 0, %v128
    %v130 = vrot.slane %v125, %v129
    %v136 = vunpack.c.l.b16 %v121
    %v137 = vunpack.c.l.b16 %v122
    %v138 = vunpack.c.l.b16 %v123
    %v139 = vunpack.c.l.b16 %v124
    %v140 = vpack.c.b16 %v137, %v136
    %v141 = vpack.c.b16 %v139, %v138
    %vm144 = vcmask 261120
    %v146 = vsel %vm144, %v120, 0
    %148 = vmatprep.subr.bf16.mxu0 0
    %149 = vmatpush1.bf16.msra.mxu0 0
    %150 = vmatprep.subr.bf16.mxu0 0
    %151 = vmatpush1.bf16.msra.mxu0 0
    %152 = vmatprep.subr.bf16.mxu0 0
    %153 = vmatpush1.bf16.msra.mxu0 0
    %154 = vmatprep.subr.bf16.mxu0 0
    %155 = vmatpush1.bf16.msra.mxu0 0
    %156 = vmatprep.subr.bf16.mxu0 0
    %157 = vmatpush1.bf16.msra.mxu0 0
    %158 = vmatprep.subr.bf16.mxu0 0
    %159 = vmatpush1.bf16.msra.mxu0 0
    %160 = vmatprep.subr.bf16.mxu0 0
    %161 = vmatpush1.bf16.msra.mxu0 %v141
    %162 = vmatprep.subr.bf16.mxu0 0
    %163 = vmatpush1.bf16.msra.mxu0 %v140
    %164 = vmatprep.subr.bf16.mxu0 0
    %165 = vmatpush2.bf16.msra.mxu0 0
    %166 = vmatprep.subr.bf16.mxu0 0
    %167 = vmatpush2.bf16.msra.mxu0 0
    %168 = vmatprep.subr.bf16.mxu0 0
    %169 = vmatpush2.bf16.msra.mxu0 0
    %170 = vmatprep.subr.bf16.mxu0 0
    %171 = vmatpush2.bf16.msra.mxu0 0
    %172 = vmatprep.subr.bf16.mxu0 0
    %173 = vmatpush2.bf16.msra.mxu0 0
    %174 = vmatprep.subr.bf16.mxu0 0
    %175 = vmatpush2.bf16.msra.mxu0 0
    %176 = vmatprep.subr.bf16.mxu0 0
    %177 = vmatpush2.bf16.msra.mxu0 0
    %178 = vmatprep.subr.bf16.mxu0 0
    %179 = vmatpush2.bf16.msra.mxu0 0
    %180 = vmatprep.mubr.bf16.mxu0 0
    %181 = vmatmul.mubr.bf16.gmra.mxu0 %v146
    %v182 = vpop.f32.mrf.mxu0
    %v183 = vadd.f32 %v130, %v182
    %v184 = vpop.f32.mrf.mxu0
    %v185 = vpop.f32.mrf.mxu0
    %v186 = vadd.f32 %v130, %v185
    %v187 = vpop.f32.mrf.mxu0
    %188 = vdwg.mxu0
    %v189 = vtanh.pop %v183
    %v190 = vtanh.pop %v186
    %v191 = vadd.f32 %v118, %v189
    %v192 = vadd.f32 %v119, %v190
    %v193 = vpack.c.bf16 %v192, %v191
    %s194 = scalar_lea.vmem [#allocation4], 16
    %v195 = vld [vmem:[%s194] sm:$0xf]
    %v196 = vld [vmem:[%s194 + $0x4] sm:$0xf]
    %v197 = vld [vmem:[%s194 + $0x8] sm:$0xf]
    %v198 = vld [vmem:[%s194 + $0xc] sm:$0xf]
    %s199 = scalar_lea.vmem %s4, 1
    %v200 = vld [vmem:[%s199] sm:$0x1]
    %v202 = vlaneseq
    %v203 = vshrl.u32 %v202, 7
    %v204 = vsub.s32 0, %v203
    %v205 = vrot.slane %v200, %v204
    %v211 = vunpack.c.l.b16 %v195
    %v212 = vunpack.c.l.b16 %v196
    %v213 = vunpack.c.l.b16 %v197
    %v214 = vunpack.c.l.b16 %v198
    %v215 = vpack.c.b16 %v212, %v211
    %v216 = vpack.c.b16 %v214, %v213
    %v220 = vsel %vm144, %v193, 0
    %222 = vmatprep.subr.bf16.mxu0 0
    %223 = vmatpush1.bf16.msra.mxu0 0
    %224 = vmatprep.subr.bf16.mxu0 0
    %225 = vmatpush1.bf16.msra.mxu0 0
    %226 = vmatprep.subr.bf16.mxu0 0
    %227 = vmatpush1.bf16.msra.mxu0 0
    %228 = vmatprep.subr.bf16.mxu0 0
    %229 = vmatpush1.bf16.msra.mxu0 0
    %230 = vmatprep.subr.bf16.mxu0 0
    %231 = vmatpush1.bf16.msra.mxu0 0
    %232 = vmatprep.subr.bf16.mxu0 0
    %233 = vmatpush1.bf16.msra.mxu0 0
    %234 = vmatprep.subr.bf16.mxu0 0
    %235 = vmatpush1.bf16.msra.mxu0 %v216
    %236 = vmatprep.subr.bf16.mxu0 0
    %237 = vmatpush1.bf16.msra.mxu0 %v215
    %238 = vmatprep.subr.bf16.mxu0 0
    %239 = vmatpush2.bf16.msra.mxu0 0
    %240 = vmatprep.subr.bf16.mxu0 0
    %241 = vmatpush2.bf16.msra.mxu0 0
    %242 = vmatprep.subr.bf16.mxu0 0
    %243 = vmatpush2.bf16.msra.mxu0 0
    %244 = vmatprep.subr.bf16.mxu0 0
    %245 = vmatpush2.bf16.msra.mxu0 0
    %246 = vmatprep.subr.bf16.mxu0 0
    %247 = vmatpush2.bf16.msra.mxu0 0
    %248 = vmatprep.subr.bf16.mxu0 0
    %249 = vmatpush2.bf16.msra.mxu0 0
    %250 = vmatprep.subr.bf16.mxu0 0
    %251 = vmatpush2.bf16.msra.mxu0 0
    %252 = vmatprep.subr.bf16.mxu0 0
    %253 = vmatpush2.bf16.msra.mxu0 0
    %254 = vmatprep.mubr.bf16.mxu0 0
    %255 = vmatmul.mubr.bf16.gmra.mxu0 %v220
    %v256 = vpop.f32.mrf.mxu0
    %v257 = vadd.f32 %v205, %v256
    %v258 = vpop.f32.mrf.mxu0
    %v259 = vpop.f32.mrf.mxu0
    %v260 = vadd.f32 %v205, %v259
    %v261 = vpop.f32.mrf.mxu0
    %262 = vdwg.mxu0
    %v263 = vtanh.pop %v257
    %v264 = vtanh.pop %v260
    %v265 = vadd.f32 %v191, %v263
    %v266 = vadd.f32 %v192, %v264
    %v267 = vpack.c.bf16 %v266, %v265
    %v268 = vld [vmem:[%s5] sm:$0xf]
    %v269 = vld [vmem:[%s5 + $0x4] sm:$0xf]
    %v270 = vld [vmem:[%s5 + $0x8] sm:$0xf]
    %v271 = vld [vmem:[%s5 + $0xc] sm:$0xf]
    %v272 = vld [vmem:[%s6] sm:$0x1]
    %v274 = vlaneseq
    %v275 = vshrl.u32 %v274, 7
    %v276 = vsub.s32 0, %v275
    %v277 = vrot.slane %v272, %v276
    %v283 = vunpack.c.l.b16 %v268
    %v284 = vunpack.c.l.b16 %v269
    %v285 = vunpack.c.l.b16 %v270
    %v286 = vunpack.c.l.b16 %v271
    %v287 = vpack.c.b16 %v284, %v283
    %v288 = vpack.c.b16 %v286, %v285
    %v292 = vsel %vm144, %v267, 0
    %294 = vmatprep.subr.bf16.mxu0 0
    %295 = vmatpush1.bf16.msra.mxu0 0
    %296 = vmatprep.subr.bf16.mxu0 0
    %297 = vmatpush1.bf16.msra.mxu0 0
    %298 = vmatprep.subr.bf16.mxu0 0
    %299 = vmatpush1.bf16.msra.mxu0 0
    %300 = vmatprep.subr.bf16.mxu0 0
    %301 = vmatpush1.bf16.msra.mxu0 0
    %302 = vmatprep.subr.bf16.mxu0 0
    %303 = vmatpush1.bf16.msra.mxu0 0
    %304 = vmatprep.subr.bf16.mxu0 0
    %305 = vmatpush1.bf16.msra.mxu0 0
    %306 = vmatprep.subr.bf16.mxu0 0
    %307 = vmatpush1.bf16.msra.mxu0 %v288
    %308 = vmatprep.subr.bf16.mxu0 0
    %309 = vmatpush1.bf16.msra.mxu0 %v287
    %310 = vmatprep.subr.bf16.mxu0 0
    %311 = vmatpush2.bf16.msra.mxu0 0
    %312 = vmatprep.subr.bf16.mxu0 0
    %313 = vmatpush2.bf16.msra.mxu0 0
    %314 = vmatprep.subr.bf16.mxu0 0
    %315 = vmatpush2.bf16.msra.mxu0 0
    %316 = vmatprep.subr.bf16.mxu0 0
    %317 = vmatpush2.bf16.msra.mxu0 0
    %318 = vmatprep.subr.bf16.mxu0 0
    %319 = vmatpush2.bf16.msra.mxu0 0
    %320 = vmatprep.subr.bf16.mxu0 0
    %321 = vmatpush2.bf16.msra.mxu0 0
    %322 = vmatprep.subr.bf16.mxu0 0
    %323 = vmatpush2.bf16.msra.mxu0 0
    %324 = vmatprep.subr.bf16.mxu0 0
    %325 = vmatpush2.bf16.msra.mxu0 0
    %326 = vmatprep.mubr.bf16.mxu0 0
    %327 = vmatmul.mubr.bf16.gmra.mxu0 %v292
    %v328 = vpop.f32.mrf.mxu0
    %v329 = vadd.f32 %v277, %v328
    %v330 = vpop.f32.mrf.mxu0
    %v331 = vpop.f32.mrf.mxu0
    %v332 = vadd.f32 %v277, %v331
    %v333 = vpop.f32.mrf.mxu0
    %334 = vdwg.mxu0
    %vm335 = vcmask 64512
    %336 = vst.msk [vmem:[%s7] sm:$0xff] %vm335, %v329
    %337 = vst.msk [vmem:[%s7 + $0x8] sm:$0xff] %vm335, %v332
    // Predicated region
    $region38: #{tpu_custom_call.1} parent=1 // pred_check
      _
    $region39: #{tpu_custom_call.1} parent=1 // pred_check_branch
      %339 = sbr.rel (0) target = $region41
    $region40: #{tpu_custom_call.1} parent=1 // pred_region
      _
    $region41: #{tpu_custom_call.1} parent=1 // pred_fallthru
      _
    // Predicated region
    $region42: #{tpu_custom_call.1} parent=1 // pred_check
      _
    $region43: #{tpu_custom_call.1} parent=1 // pred_check_branch
      %341 = sbr.rel (0) target = $region45
    $region44: #{tpu_custom_call.1} parent=1 // pred_region
      _
    $region45: #{tpu_custom_call.1} parent=1 // pred_fallthru
      _
    %342 = vsyncpa [#allocation3], 1
    %343 = vsyncpa [#allocation5], 1

</llo_original>
